<compile_context>
chip_gen: v5e
topology: v5e:2x2
jax: 0.10.0
libtpu: 0.0.40
codegen_flags: <defaults>
</compile_context>

<pallas_src>
import jax
import jax.numpy as jnp
from jax.experimental import pallas as pl
from jax.experimental.pallas import tpu as pltpu

_LANE = 128
_SUBLANE = 8


def _round_up(x, m):
    return ((x + m - 1) // m) * m


def _mlp_kernel(x_ref, w1_ref, b1_ref, w2_ref, b2_ref, o_ref):
    # Feature-major layout:
    #   x:  [n_in, TB]          (batch on lanes)
    #   w1: [hidden_p, n_in]    (original torch layout, resident)
    #   b1: [hidden_p, 1]
    #   w2: [n_out_s, hidden_p] (sublane-padded to >= 8 rows, resident)
    #   b2: [n_out_s, 1]
    #   o:  [n_out, TB]         (lane-dense output store)
    x = x_ref[...]
    w1 = w1_ref[...]
    n_in = x.shape[0]

    if n_in <= _SUBLANE:
        # Tiny contraction depth: n_in rank-1 FMAs on the VPU instead of an MXU pass.
        acc = w1[:, 0:1] * x[0:1, :]
        for k in range(1, n_in):
            acc = acc + w1[:, k : k + 1] * x[k : k + 1, :]
    else:
        acc = jnp.dot(w1, x, preferred_element_type=jnp.float32)

    h = jnp.tanh(acc + b1_ref[...])  # [hidden_p, TB], EUP transcendental

    # Second layer on the MXU with explicit f32 accumulation.
    out = jnp.dot(w2_ref[...], h, preferred_element_type=jnp.float32) + b2_ref[...]

    n_out = o_ref.shape[0]
    o_ref[...] = out[:n_out, :].astype(o_ref.dtype)


def bayesian_regressor_forward(x, w1, b1, w2, b2, *, tb_max=4096):
    """x: [B, n_in] f32. w1: [hidden, n_in], b1: [hidden], w2: [n_out, hidden], b2: [n_out].

    Returns [B, n_out] float32.
    """
    B, n_in = x.shape
    hidden, _ = w1.shape
    n_out, _ = w2.shape

    # Minimal padding: hidden to a sublane multiple (no extra tanh work for hidden=64),
    # n_out to >= 8 rows only for the in-VMEM matmul operands (not for the HBM output).
    hidden_p = _round_up(hidden, _SUBLANE)
    n_out_s = _round_up(max(n_out, _SUBLANE), _SUBLANE)

    # One-time layout plumbing in XLA (outside the hot path).
    w1p = jnp.zeros((hidden_p, n_in), jnp.float32).at[:hidden, :].set(w1)
    b1p = jnp.zeros((hidden_p, 1), jnp.float32).at[:hidden, 0].set(b1)
    w2p = jnp.zeros((n_out_s, hidden_p), jnp.float32).at[:n_out, :hidden].set(w2)
    b2p = jnp.zeros((n_out_s, 1), jnp.float32).at[:n_out, 0].set(b2)

    # Batch tiling along the lane axis: TB is a multiple of 128 for lane-dense DMA/stores.
    tb_max = _round_up(max(tb_max, _LANE), _LANE)
    B128 = _round_up(B, _LANE)
    TB = min(tb_max, B128)
    if TB == B128 and B128 >= 2 * _LANE and B128 % (2 * _LANE) == 0:
        # Give the "parallel" grid axis >= 2 steps (for free, no extra padding) so v7x
        # can shard the batch tiles across both TensorCores.
        TB = B128 // 2
    B_pad = _round_up(B128, TB)

    # Feature-major, lane-dense x stream: [n_in, B_pad] (padded batch columns are zero;
    # their outputs are garbage-but-finite and sliced off below).
    x_t = jnp.zeros((n_in, B_pad), jnp.float32).at[:, :B].set(x.T)

    grid = (B_pad // TB,)

    out_fm = pl.pallas_call(
        _mlp_kernel,
        out_shape=jax.ShapeDtypeStruct((n_out, B_pad), jnp.float32),
        grid=grid,
        in_specs=[
            pl.BlockSpec((n_in, TB), lambda i: (0, i)),           # x tiles over batch (lanes)
            pl.BlockSpec((hidden_p, n_in), lambda i: (0, 0)),     # w1 resident
            pl.BlockSpec((hidden_p, 1), lambda i: (0, 0)),        # b1 resident
            pl.BlockSpec((n_out_s, hidden_p), lambda i: (0, 0)),  # w2 resident
            pl.BlockSpec((n_out_s, 1), lambda i: (0, 0)),         # b2 resident
        ],
        out_specs=pl.BlockSpec((n_out, TB), lambda i: (0, i)),    # lane-dense, unpadded output
        compiler_params=pltpu.CompilerParams(
            dimension_semantics=("parallel",),
            vmem_limit_bytes=32 * 1024 * 1024,  # raise v5e's 16 MiB scoped default
        ),
    )(x_t, w1p, b1p, w2p, b2p)

    # [n_out, B_pad] -> [B, n_out]; cheap fixup (n_out is tiny).
    return out_fm[:, :B].T


def make_bayes_linear_params(key, in_features, out_features, prior_sigma=0.1):
    """Deterministic synthetic BayesLinear parameters + sampled weights."""
    k_wmu, k_bmu, k_weps, k_beps = jax.random.split(key, 4)
    # mu parameters (synthetic deterministic init)
    w_mu = 0.1 * jax.random.normal(k_wmu, (out_features, in_features), jnp.float32)
    b_mu = 0.1 * jax.random.normal(k_bmu, (out_features,), jnp.float32)
    # log_sigma initialized at log(prior_sigma) as in torchbnn
    w_log_sigma = jnp.full((out_features, in_features), jnp.log(prior_sigma), jnp.float32)
    b_log_sigma = jnp.full((out_features,), jnp.log(prior_sigma), jnp.float32)
    # reparameterized sample:  W = mu + exp(log_sigma) * eps
    w_eps = jax.random.normal(k_weps, (out_features, in_features), jnp.float32)
    b_eps = jax.random.normal(k_beps, (out_features,), jnp.float32)
    w = w_mu + jnp.exp(w_log_sigma) * w_eps
    b = b_mu + jnp.exp(b_log_sigma) * b_eps
    return w, b


if __name__ == "__main__":
    n_inputs, n_outputs, hidden_size = 2, 1, 64
    batch = 8

    key = jax.random.PRNGKey(0)
    k_x, k_l1, k_l2 = jax.random.split(key, 3)

    x = jax.random.normal(k_x, (batch, n_inputs), jnp.float32)
    w1, b1 = make_bayes_linear_params(k_l1, n_inputs, hidden_size)
    w2, b2 = make_bayes_linear_params(k_l2, hidden_size, n_outputs)

    out = bayesian_regressor_forward(x, w1, b1, w2, b2)
    out = jax.block_until_ready(out)

    # Reference check in plain JAX (same math).
    ref = jnp.tanh(x @ w1.T + b1) @ w2.T + b2
    assert out.shape == (batch, n_outputs)
    assert jnp.allclose(out, ref, atol=1e-5, rtol=1e-5)

    print("KERNEL_OK")
</pallas_src>

<mosaic_0001>
module attributes {stable_mosaic.version = 11 : i64} {
  func.func @_mlp_kernel(%arg0: i32, %arg1: memref<2x128xf32, #tpu.memory_space<vmem>>, %arg2: memref<64x2xf32, #tpu.memory_space<vmem>>, %arg3: memref<64x1xf32, #tpu.memory_space<vmem>>, %arg4: memref<8x64xf32, #tpu.memory_space<vmem>>, %arg5: memref<8x1xf32, #tpu.memory_space<vmem>>, %arg6: memref<1x128xf32, #tpu.memory_space<vmem>>) attributes {dimension_semantics = [#tpu.dimension_semantics<parallel>], iteration_bounds = array<i64: 1>, scalar_prefetch = 0 : i64, scratch_operands = 0 : i64, tpu.core_type = #tpu.core_type<tc>, window_params = [{transform_indices = @transform_0, window_bounds = array<i64: 2, 128>}, {pipeline_mode = #tpu.pipeline_mode<synchronous>, transform_indices = @transform_1, window_bounds = array<i64: 64, 2>}, {pipeline_mode = #tpu.pipeline_mode<synchronous>, transform_indices = @transform_2, window_bounds = array<i64: 64, 1>}, {pipeline_mode = #tpu.pipeline_mode<synchronous>, transform_indices = @transform_3, window_bounds = array<i64: 8, 64>}, {pipeline_mode = #tpu.pipeline_mode<synchronous>, transform_indices = @transform_4, window_bounds = array<i64: 8, 1>}, {transform_indices = @transform_5, window_bounds = array<i64: 1, 128>}]} {
    %c0 = arith.constant 0 : index
    %c0_0 = arith.constant 0 : index
    %0 = vector.load %arg1[%c0, %c0_0] : memref<2x128xf32, #tpu.memory_space<vmem>>, vector<2x128xf32>
    %c0_1 = arith.constant 0 : index
    %c0_2 = arith.constant 0 : index
    %1 = vector.load %arg2[%c0_1, %c0_2] : memref<64x2xf32, #tpu.memory_space<vmem>>, vector<64x2xf32>
    %2 = vector.extract_strided_slice %1 {offsets = [0, 0], sizes = [64, 1], strides = [1, 1]} : vector<64x2xf32> to vector<64x1xf32>
    %3 = vector.extract_strided_slice %0 {offsets = [0, 0], sizes = [1, 128], strides = [1, 1]} : vector<2x128xf32> to vector<1x128xf32>
    %4 = vector.broadcast %2 : vector<64x1xf32> to vector<64x128xf32>
    %5 = vector.broadcast %3 : vector<1x128xf32> to vector<64x128xf32>
    %6 = arith.mulf %4, %5 : vector<64x128xf32>
    %7 = vector.extract_strided_slice %1 {offsets = [0, 1], sizes = [64, 1], strides = [1, 1]} : vector<64x2xf32> to vector<64x1xf32>
    %8 = vector.extract_strided_slice %0 {offsets = [1, 0], sizes = [1, 128], strides = [1, 1]} : vector<2x128xf32> to vector<1x128xf32>
    %9 = vector.broadcast %7 : vector<64x1xf32> to vector<64x128xf32>
    %10 = vector.broadcast %8 : vector<1x128xf32> to vector<64x128xf32>
    %11 = arith.mulf %9, %10 : vector<64x128xf32>
    %12 = arith.addf %6, %11 : vector<64x128xf32>
    %c0_3 = arith.constant 0 : index
    %c0_4 = arith.constant 0 : index
    %13 = vector.load %arg3[%c0_3, %c0_4] : memref<64x1xf32, #tpu.memory_space<vmem>>, vector<64x1xf32>
    %14 = vector.broadcast %13 : vector<64x1xf32> to vector<64x128xf32>
    %15 = arith.addf %12, %14 : vector<64x128xf32>
    %16 = math.tanh %15 : vector<64x128xf32>
    %c0_5 = arith.constant 0 : index
    %c0_6 = arith.constant 0 : index
    %17 = vector.load %arg4[%c0_5, %c0_6] : memref<8x64xf32, #tpu.memory_space<vmem>>, vector<8x64xf32>
    %cst = arith.constant dense<0.000000e+00> : vector<8x128xf32>
    %18 = tpu.matmul %17, %16, %cst {dimension_numbers = #tpu.dot_dimension_numbers<[1], [0], [0], [1], [0, 0, 1, 1], [], []>} : vector<8x64xf32>, vector<64x128xf32>, vector<8x128xf32> -> vector<8x128xf32>
    %c0_7 = arith.constant 0 : index
    %c0_8 = arith.constant 0 : index
    %19 = vector.load %arg5[%c0_7, %c0_8] : memref<8x1xf32, #tpu.memory_space<vmem>>, vector<8x1xf32>
    %20 = vector.broadcast %19 : vector<8x1xf32> to vector<8x128xf32>
    %21 = arith.addf %18, %20 : vector<8x128xf32>
    %22 = vector.extract_strided_slice %21 {offsets = [0, 0], sizes = [1, 128], strides = [1, 1]} : vector<8x128xf32> to vector<1x128xf32>
    %c0_9 = arith.constant 0 : index
    %c0_10 = arith.constant 0 : index
    %23 = vector.load %arg6[%c0_9, %c0_10] : memref<1x128xf32, #tpu.memory_space<vmem>>, vector<1x128xf32>
    tpu.vector_store %arg6[%c0_9, %c0_10], %22 {strides = array<i32>} : memref<1x128xf32, #tpu.memory_space<vmem>>, vector<1x128xf32>,
    return
  }
  func.func @transform_0(%arg0: i32) -> (i32, i32) {
    %c0_i32 = arith.constant 0 : i32
    %c0_i32_0 = arith.constant 0 : i32
    return %c0_i32, %arg0 : i32, i32
  }
  func.func @transform_1(%arg0: i32) -> (i32, i32) {
    %c0_i32 = arith.constant 0 : i32
    %c0_i32_0 = arith.constant 0 : i32
    %c0_i32_1 = arith.constant 0 : i32
    return %c0_i32, %c0_i32_0 : i32, i32
  }
  func.func @transform_2(%arg0: i32) -> (i32, i32) {
    %c0_i32 = arith.constant 0 : i32
    %c0_i32_0 = arith.constant 0 : i32
    %c0_i32_1 = arith.constant 0 : i32
    return %c0_i32, %c0_i32_0 : i32, i32
  }
  func.func @transform_3(%arg0: i32) -> (i32, i32) {
    %c0_i32 = arith.constant 0 : i32
    %c0_i32_0 = arith.constant 0 : i32
    %c0_i32_1 = arith.constant 0 : i32
    return %c0_i32, %c0_i32_0 : i32, i32
  }
  func.func @transform_4(%arg0: i32) -> (i32, i32) {
    %c0_i32 = arith.constant 0 : i32
    %c0_i32_0 = arith.constant 0 : i32
    %c0_i32_1 = arith.constant 0 : i32
    return %c0_i32, %c0_i32_0 : i32, i32
  }
  func.func @transform_5(%arg0: i32) -> (i32, i32) {
    %c0_i32 = arith.constant 0 : i32
    %c0_i32_0 = arith.constant 0 : i32
    return %c0_i32, %arg0 : i32, i32
  }
}

</mosaic_0001>

<llo_original>
// kernel: tpu_custom_call.1
$region0: #{tpu_custom_call.1}
  #allocation0 [shape = 'u32[]', space=smem, size = 0x4, offset = 0x4, fixed_abs, tag = 'smem constant byte address 0x4 - core index']
  #allocation1 [shape = 'u32[72,128]{1,0:T(1,128)}', space=vmem, size = 0x9000, scoped, tag = 'internal scratch']
  %s0 = inlined_call_operand.vmem [shape: f32[2,128], index: 0, kind: input, shape index: {}]
  %s1 = inlined_call_operand.vmem [shape: f32[64,2], index: 1, kind: input, shape index: {}]
  %s2 = inlined_call_operand.vmem [shape: f32[64,1], index: 2, kind: input, shape index: {}]
  %s3 = inlined_call_operand.vmem [shape: f32[8,64], index: 3, kind: input, shape index: {}]
  %s4 = inlined_call_operand.vmem [shape: f32[8,1], index: 4, kind: input, shape index: {}]
  %s5 = inlined_call_operand.hbm [shape: f32[1,128], index: 5, kind: output, shape index: {}]
  %s6 = sld [smem:[#allocation0]]
  $region30: #{tpu_custom_call.1} parent=0
    _
  %s8 = ssub.s32 1, %s6
  %s9 = scalar_select 0, %s8, %s6
  $region1: #{tpu_custom_call.1} parent=0
    #allocation2 [shape = 'u8[512]{0}', space=vmem, size = 0x400, scoped, tag = 'output window, operand 0, single buffered']
    #allocation3 [shape = 's32[1]{0}', space=sflag, size = 0x4, scoped, tag = 'scoped memory for tpu_custom_call.1']
    %10 = vsyncpa [#allocation3], 0
    // Predicated region
    $region2: #{tpu_custom_call.1} parent=1 // pred_check
      _
    $region3: #{tpu_custom_call.1} parent=1 // pred_check_branch
      %12 = sbr.rel (0) target = $region5
    $region4: #{tpu_custom_call.1} parent=1 // pred_region
      _
    $region5: #{tpu_custom_call.1} parent=1 // pred_fallthru
      _
    // Predicated region
    $region6: #{tpu_custom_call.1} parent=1 // pred_check
      _
    $region7: #{tpu_custom_call.1} parent=1 // pred_check_branch
      %14 = sbr.rel (0) target = $region9
    $region8: #{tpu_custom_call.1} parent=1 // pred_region
      _
    $region9: #{tpu_custom_call.1} parent=1 // pred_fallthru
      _
    // Predicated region
    $region10: #{tpu_custom_call.1} parent=1 // pred_check
      _
    $region11: #{tpu_custom_call.1} parent=1 // pred_check_branch
      %16 = sbr.rel (0) target = $region13
    $region12: #{tpu_custom_call.1} parent=1 // pred_region
      _
    $region13: #{tpu_custom_call.1} parent=1 // pred_fallthru
      _
    // Predicated region
    $region14: #{tpu_custom_call.1} parent=1 // pred_check
      _
    $region15: #{tpu_custom_call.1} parent=1 // pred_check_branch
      %18 = sbr.rel (0) target = $region17
    $region16: #{tpu_custom_call.1} parent=1 // pred_region
      _
    $region17: #{tpu_custom_call.1} parent=1 // pred_fallthru
      _
    // Predicated region
    $region18: #{tpu_custom_call.1} parent=1 // pred_check
      _
    $region19: #{tpu_custom_call.1} parent=1 // pred_check_branch
      %20 = sbr.rel (0) target = $region21
    $region20: #{tpu_custom_call.1} parent=1 // pred_region
      _
    $region21: #{tpu_custom_call.1} parent=1 // pred_fallthru
      _
    %v21 = vld [vmem:[%s0] sm:$0x3]
    %v22 = vld [vmem:[%s1] sm:$0xff]
    %v23 = vld [vmem:[%s1 + $0x8] sm:$0xff]
    %v24 = vld [vmem:[%s1 + $0x10] sm:$0xff]
    %v25 = vld [vmem:[%s1 + $0x18] sm:$0xff]
    %v26 = vld [vmem:[%s1 + $0x20] sm:$0xff]
    %v27 = vld [vmem:[%s1 + $0x28] sm:$0xff]
    %v28 = vld [vmem:[%s1 + $0x30] sm:$0xff]
    %v29 = vld [vmem:[%s1 + $0x38] sm:$0xff]
    %31 = vset.pattern.permute.xlu0 0
    %32 = vperm.xlu0 %31, %v22
    %v33 = vpop.permute.xlu0 %32
    %36 = vset.pattern.permute.xlu0 0
    %37 = vperm.xlu0 %36, %v23
    %v38 = vpop.permute.xlu0 %37
    %41 = vset.pattern.permute.xlu0 0
    %42 = vperm.xlu0 %41, %v24
    %v43 = vpop.permute.xlu0 %42
    %46 = vset.pattern.permute.xlu0 0
    %47 = vperm.xlu0 %46, %v25
    %v48 = vpop.permute.xlu0 %47
    %51 = vset.pattern.permute.xlu0 0
    %52 = vperm.xlu0 %51, %v26
    %v53 = vpop.permute.xlu0 %52
    %56 = vset.pattern.permute.xlu0 0
    %57 = vperm.xlu0 %56, %v27
    %v58 = vpop.permute.xlu0 %57
    %61 = vset.pattern.permute.xlu0 0
    %62 = vperm.xlu0 %61, %v28
    %v63 = vpop.permute.xlu0 %62
    %66 = vset.pattern.permute.xlu0 0
    %67 = vperm.xlu0 %66, %v29
    %v68 = vpop.permute.xlu0 %67
    %v70 = vperm.slane %v21, 0
    %v71 = vmul.f32 %v33, %v70
    %v72 = vmul.f32 %v38, %v70
    %v73 = vmul.f32 %v43, %v70
    %v74 = vmul.f32 %v48, %v70
    %v75 = vmul.f32 %v53, %v70
    %v76 = vmul.f32 %v58, %v70
    %v77 = vmul.f32 %v63, %v70
    %v78 = vmul.f32 %v68, %v70
    %79 = vset.pattern.permute.xlu0 1
    %80 = vperm.xlu0 %79, %v22
    %v81 = vpop.permute.xlu0 %80
    %83 = vset.pattern.permute.xlu0 1
    %84 = vperm.xlu0 %83, %v23
    %v85 = vpop.permute.xlu0 %84
    %87 = vset.pattern.permute.xlu0 1
    %88 = vperm.xlu0 %87, %v24
    %v89 = vpop.permute.xlu0 %88
    %91 = vset.pattern.permute.xlu0 1
    %92 = vperm.xlu0 %91, %v25
    %v93 = vpop.permute.xlu0 %92
    %95 = vset.pattern.permute.xlu0 1
    %96 = vperm.xlu0 %95, %v26
    %v97 = vpop.permute.xlu0 %96
    %99 = vset.pattern.permute.xlu0 1
    %100 = vperm.xlu0 %99, %v27
    %v101 = vpop.permute.xlu0 %100
    %103 = vset.pattern.permute.xlu0 1
    %104 = vperm.xlu0 %103, %v28
    %v105 = vpop.permute.xlu0 %104
    %107 = vset.pattern.permute.xlu0 1
    %108 = vperm.xlu0 %107, %v29
    %v109 = vpop.permute.xlu0 %108
    %v111 = vperm.slane %v21, 1
    %v112 = vmul.f32 %v81, %v111
    %v113 = vmul.f32 %v85, %v111
    %v114 = vmul.f32 %v89, %v111
    %v115 = vmul.f32 %v93, %v111
    %v116 = vmul.f32 %v97, %v111
    %v117 = vmul.f32 %v101, %v111
    %v118 = vmul.f32 %v105, %v111
    %v119 = vmul.f32 %v109, %v111
    %v120 = vadd.f32 %v71, %v112
    %v121 = vadd.f32 %v72, %v113
    %v122 = vadd.f32 %v73, %v114
    %v123 = vadd.f32 %v74, %v115
    %v124 = vadd.f32 %v75, %v116
    %v125 = vadd.f32 %v76, %v117
    %v126 = vadd.f32 %v77, %v118
    %v127 = vadd.f32 %v78, %v119
    %v128 = vld [vmem:[%s2] sm:$0xff]
    %v129 = vld [vmem:[%s2 + $0x8] sm:$0xff]
    %v130 = vld [vmem:[%s2 + $0x10] sm:$0xff]
    %v131 = vld [vmem:[%s2 + $0x18] sm:$0xff]
    %v132 = vld [vmem:[%s2 + $0x20] sm:$0xff]
    %v133 = vld [vmem:[%s2 + $0x28] sm:$0xff]
    %v134 = vld [vmem:[%s2 + $0x30] sm:$0xff]
    %v135 = vld [vmem:[%s2 + $0x38] sm:$0xff]
    %137 = vset.pattern.permute.xlu0 0
    %138 = vperm.xlu0 %137, %v128
    %v139 = vpop.permute.xlu0 %138
    %142 = vset.pattern.permute.xlu0 0
    %143 = vperm.xlu0 %142, %v129
    %v144 = vpop.permute.xlu0 %143
    %147 = vset.pattern.permute.xlu0 0
    %148 = vperm.xlu0 %147, %v130
    %v149 = vpop.permute.xlu0 %148
    %152 = vset.pattern.permute.xlu0 0
    %153 = vperm.xlu0 %152, %v131
    %v154 = vpop.permute.xlu0 %153
    %157 = vset.pattern.permute.xlu0 0
    %158 = vperm.xlu0 %157, %v132
    %v159 = vpop.permute.xlu0 %158
    %162 = vset.pattern.permute.xlu0 0
    %163 = vperm.xlu0 %162, %v133
    %v164 = vpop.permute.xlu0 %163
    %167 = vset.pattern.permute.xlu0 0
    %168 = vperm.xlu0 %167, %v134
    %v169 = vpop.permute.xlu0 %168
    %172 = vset.pattern.permute.xlu0 0
    %173 = vperm.xlu0 %172, %v135
    %v174 = vpop.permute.xlu0 %173
    %v176 = vadd.f32 %v120, %v139
    %v177 = vadd.f32 %v121, %v144
    %v178 = vadd.f32 %v122, %v149
    %v179 = vadd.f32 %v123, %v154
    %v180 = vadd.f32 %v124, %v159
    %v181 = vadd.f32 %v125, %v164
    %v182 = vadd.f32 %v126, %v169
    %v183 = vadd.f32 %v127, %v174
    %v184 = vtanh.pop %v176
    %v185 = vtanh.pop %v177
    %v186 = vtanh.pop %v178
    %v187 = vtanh.pop %v179
    %v188 = vtanh.pop %v180
    %v189 = vtanh.pop %v181
    %v190 = vtanh.pop %v182
    %v191 = vtanh.pop %v183
    %v192 = vld [vmem:[%s3] sm:$0xff]
    %v193 = vld [vmem:[%s4] sm:$0xff]
    %195 = vset.pattern.permute.xlu0 0
    %196 = vperm.xlu0 %195, %v193
    %v197 = vpop.permute.xlu0 %196
    %vm199 = vcmask 523264
    %v201 = vsel %vm199, %v192, 0
    %203 = vmatpush.msra.mxu0 0.0
    %204 = vmatpush.msra.mxu0 0.0
    %205 = vmatpush.msra.mxu0 0.0
    %206 = vmatpush.msra.mxu0 0.0
    %207 = vmatpush.msra.mxu0 0.0
    %208 = vmatpush.msra.mxu0 0.0
    %209 = vmatpush.msra.mxu0 0.0
    %210 = vmatpush.msra.mxu0 0.0
    %211 = vmatpush.msra.mxu0 %v191
    %212 = vmatpush.msra.mxu0 %v190
    %213 = vmatpush.msra.mxu0 %v189
    %214 = vmatpush.msra.mxu0 %v188
    %215 = vmatpush.msra.mxu0 %v187
    %216 = vmatpush.msra.mxu0 %v186
    %217 = vmatpush.msra.mxu0 %v185
    %218 = vmatpush.msra.mxu0 %v184
    %219 = vmatmul.f32.gmra.mxu0 %v201
    %v220 = vpop.f32.mrf.mxu0
    %v221 = vadd.f32 %v197, %v220
    %222 = vdwg.mxu0
    %223 = vst [vmem:[#allocation2] sm:$0x1] %v221
    // Predicated region
    $region22: #{tpu_custom_call.1} parent=1 // pred_check
      _
    $region23: #{tpu_custom_call.1} parent=1 // pred_check_branch
      %225 = sbr.rel (0) target = $region25
    $region24: #{tpu_custom_call.1} parent=1 // pred_region
      %227 = vsyncadd [#allocation3], 0
      %s229 = sshll.u32 [#allocation2], 4
      %s230 = int_to_ptr.vmem [resolvable:$true] %s229
      %s231 = sshll.u32 %s5, 4
      %s232 = int_to_ptr.hbm [resolvable:$true] %s231
      %234 = dma.vmem_to_hbm [thread:$0]  %s230, 16, %s232, [#allocation3]
    $region25: #{tpu_custom_call.1} parent=1 // pred_fallthru
      _
    // Predicated region
    $region26: #{tpu_custom_call.1} parent=1 // pred_check
      _
    $region27: #{tpu_custom_call.1} parent=1 // pred_check_branch
      %236 = sbr.rel (0) target = $region29
    $region28: #{tpu_custom_call.1} parent=1 // pred_region
      %238 = dma.done [#allocation3], 16
    $region29: #{tpu_custom_call.1} parent=1 // pred_fallthru
      _
    %239 = vsyncpa [#allocation3], 1

</llo_original>
